<compile_context>
chip_gen: v7x
topology: tpu7x:2x2x1
jax: 0.10.0
libtpu: 0.0.40
codegen_flags: <defaults>
</compile_context>

<pallas_src>
import functools

import jax
import jax.numpy as jnp
from jax.experimental import pallas as pl
from jax.experimental.pallas import tpu as pltpu


def _round_up(x: int, m: int) -> int:
    return ((x + m - 1) // m) * m


def cossim_kernel(x1_ref, x2t_ref, o_ref):
    """One output tile: (tm, D) @ (D, tn) on the MXU, then ReLU."""
    sim = jnp.dot(x1_ref[...], x2t_ref[...], preferred_element_type=jnp.float32)
    o_ref[...] = jnp.maximum(sim, 0.0).astype(o_ref.dtype)


@functools.partial(jax.jit, static_argnames=("tm", "tn", "cast_to_bf16"))
def cos_similarity(x1, x2, *, tm=128, tn=256, cast_to_bf16=False):
    """maximum(0, x1 @ x2.T) — matches CosSimilarity.forward."""
    M, D = x1.shape
    N, D2 = x2.shape
    assert D == D2, "feature dims must match"

    out_dtype = x1.dtype

    if cast_to_bf16:
        # ~3x MXU throughput, half the HBM bytes; f32 accumulate kept in-kernel.
        x1 = x1.astype(jnp.bfloat16)
        x2 = x2.astype(jnp.bfloat16)

    # One-time transpose so the contraction dim (D) is the RHS leading dim.
    x2t = x2.T  # [D, N]

    # Adapt tiles to the problem size (sublane/lane aligned), then pad ragged
    # M/N up to tile multiples; padded rows/cols are zeros and sliced off.
    tm = min(tm, _round_up(M, 8))
    tn = min(tn, _round_up(N, 128))
    Mp = _round_up(M, tm)
    Np = _round_up(N, tn)
    if Mp != M:
        x1 = jnp.pad(x1, ((0, Mp - M), (0, 0)))
    if Np != N:
        x2t = jnp.pad(x2t, ((0, 0), (0, Np - N)))

    grid = (Mp // tm, Np // tn)

    out = pl.pallas_call(
        cossim_kernel,
        out_shape=jax.ShapeDtypeStruct((Mp, Np), out_dtype),
        grid_spec=pltpu.PrefetchScalarGridSpec(
            num_scalar_prefetch=0,
            grid=grid,
            in_specs=[
                pl.BlockSpec((tm, D), lambda i, j: (i, 0)),   # x1 slab (full K)
                pl.BlockSpec((D, tn), lambda i, j: (0, j)),   # x2^T slab (full K)
            ],
            out_specs=pl.BlockSpec((tm, tn), lambda i, j: (i, j)),
        ),
        compiler_params=pltpu.CompilerParams(
            dimension_semantics=("parallel", "parallel"),
            vmem_limit_bytes=48 * 1024 * 1024,
        ),
    )(x1, x2t)

    return out[:M, :N]


def _l2_normalize(x, axis=-1, eps=1e-12):
    return x / jnp.maximum(jnp.linalg.norm(x, axis=axis, keepdims=True), eps)


if __name__ == "__main__":
    key = jax.random.PRNGKey(0)
    k1, k2 = jax.random.split(key)

    # Small shapes consistent with the tracker use-case:
    # M gallery features vs N query features, feature dim D.
    M, N, D = 16, 512, 256
    x1 = _l2_normalize(jax.random.normal(k1, (M, D), dtype=jnp.float32))
    x2 = _l2_normalize(jax.random.normal(k2, (N, D), dtype=jnp.float32))

    sim = cos_similarity(x1, x2)
    sim = jax.block_until_ready(sim)

    # Reference check against plain JAX (f32 path, tight tolerance).
    ref = jnp.maximum(0.0, x1 @ x2.T)
    assert sim.shape == (M, N)
    assert jnp.allclose(sim, ref, atol=1e-5, rtol=1e-5), "mismatch vs reference"

    # Optional fast path (bf16 inputs, f32 accumulate) — relaxed tolerance.
    sim_bf16 = jax.block_until_ready(cos_similarity(x1, x2, cast_to_bf16=True))
    assert jnp.allclose(sim_bf16, ref, atol=2e-2, rtol=2e-2), "bf16 path mismatch"

    print("KERNEL_OK")
</pallas_src>

<mosaic_0001>
module attributes {stable_mosaic.version = 11 : i64} {
  func.func @cossim_kernel(%arg0: i32, %arg1: i32, %arg2: memref<16x256xf32, #tpu.memory_space<vmem>>, %arg3: memref<256x256xf32, #tpu.memory_space<vmem>>, %arg4: memref<16x256xf32, #tpu.memory_space<vmem>>) attributes {dimension_semantics = [#tpu.dimension_semantics<parallel>, #tpu.dimension_semantics<parallel>], iteration_bounds = array<i64: 1, 2>, scalar_prefetch = 0 : i64, scratch_operands = 0 : i64, tpu.core_type = #tpu.core_type<tc>, window_params = [{transform_indices = @transform_0, window_bounds = array<i64: 16, 256>}, {transform_indices = @transform_1, window_bounds = array<i64: 256, 256>}, {transform_indices = @transform_2, window_bounds = array<i64: 16, 256>}]} {
    %c0 = arith.constant 0 : index
    %c0_0 = arith.constant 0 : index
    %0 = vector.load %arg2[%c0, %c0_0] : memref<16x256xf32, #tpu.memory_space<vmem>>, vector<16x256xf32>
    %c0_1 = arith.constant 0 : index
    %c0_2 = arith.constant 0 : index
    %1 = vector.load %arg3[%c0_1, %c0_2] : memref<256x256xf32, #tpu.memory_space<vmem>>, vector<256x256xf32>
    %cst = arith.constant dense<0.000000e+00> : vector<16x256xf32>
    %2 = tpu.matmul %0, %1, %cst {dimension_numbers = #tpu.dot_dimension_numbers<[1], [0], [0], [1], [0, 0, 1, 1], [], []>} : vector<16x256xf32>, vector<256x256xf32>, vector<16x256xf32> -> vector<16x256xf32>
    %cst_3 = arith.constant 0.000000e+00 : f32
    %3 = vector.broadcast %cst_3 : f32 to vector<16x256xf32>
    %4 = arith.maximumf %2, %3 : vector<16x256xf32>
    %c0_4 = arith.constant 0 : index
    %c0_5 = arith.constant 0 : index
    %5 = vector.load %arg4[%c0_4, %c0_5] : memref<16x256xf32, #tpu.memory_space<vmem>>, vector<16x256xf32>
    tpu.vector_store %arg4[%c0_4, %c0_5], %4 {strides = array<i32>} : memref<16x256xf32, #tpu.memory_space<vmem>>, vector<16x256xf32>,
    return
  }
  func.func @transform_0(%arg0: i32, %arg1: i32) -> (i32, i32) {
    %c0_i32 = arith.constant 0 : i32
    %c0_i32_0 = arith.constant 0 : i32
    return %arg0, %c0_i32 : i32, i32
  }
  func.func @transform_1(%arg0: i32, %arg1: i32) -> (i32, i32) {
    %c0_i32 = arith.constant 0 : i32
    %c0_i32_0 = arith.constant 0 : i32
    return %c0_i32, %arg1 : i32, i32
  }
  func.func @transform_2(%arg0: i32, %arg1: i32) -> (i32, i32) {
    %c0_i32 = arith.constant 0 : i32
    return %arg0, %arg1 : i32, i32
  }
}

</mosaic_0001>

<llo_original>
// kernel: cos_similarity.1
$region0: #{cos_similarity.1}
  #allocation0 [shape = 'u32[]', space=smem, size = 0x4, offset = 0x4, fixed_abs, tag = 'smem constant byte address 0x4 - core index']
  #allocation1 [shape = 'u32[144,128]{1,0:T(1,128)}', space=vmem, size = 0x12000, scoped, tag = 'internal scratch']
  %s0 = inlined_call_operand.vmem [shape: f32[16,256], index: 0, kind: input, shape index: {}]
  %s1 = inlined_call_operand.vmem [shape: f32[256,512], index: 1, kind: input, shape index: {}]
  %s2 = inlined_call_operand.hbm [shape: f32[16,512], index: 2, kind: output, shape index: {}]
  %s3 = sld [smem:[#allocation0]]
  $region64: #{cos_similarity.1} parent=0
    _
  %s5 = ssub.s32 1, %s3
  %s6 = scalar_select 0, %s5, %s3
  $region1: #{cos_similarity.1} parent=0
    #allocation2 [shape = 'u8[524288]{0}', space=vmem, size = 0x80000, scoped, tag = 'input window, operand 1']
    #allocation3 [shape = 'u8[32768]{0}', space=vmem, size = 0x8000, scoped, tag = 'output window, operand 0']
    #allocation4 [shape = 's32[2]{0}', space=sflag, size = 0x8, scoped, tag = 'scoped memory for cos_similarity.1']
    %7 = vsyncpa [#allocation4], 0
    %s8 = scalar_lea.sflag [#allocation4], 1
    %9 = vsyncpa %s8, 0
    loop: start=0, step=1, limit=4
    $region2: #{cos_similarity.1} parent=1 // loop_pre_header
      _
    $region3: #{cos_similarity.1} parent=1 // loop_header
      %s11 = sphi 0, %s15
      %p12 = scmp.ge.s32.totalorder %s11, 4
      %s18 = sphi 0, %s30
      %s19 = sphi 0, %s26
      %s20 = sphi 0, %s18
      %s21 = sphi 0, %s19
      %s22 = sphi 0, %s20
      %s23 = sphi 0, %s21
      %s33 = sphi 0, %s35
      %s36 = sphi 0, %s33
      %s37 = sphi 0, %s36
      %s53 = sphi 0, %s37
      %s59 = sphi 0, %s61
      %s62 = sphi 0, %s59
      %s63 = sphi 0, %s62
      %s79 = sphi 0, %s63
      %s87 = sphi 0, %s89
      %s90 = sphi 0, %s87
      %s91 = sphi 0, %s90
      %s107 = sphi 0, %s91
    $region4: #{cos_similarity.1} parent=1 // loop_header_branch
      %14 = sbr.rel (%p12) target = $region8
    $region5: #{cos_similarity.1} parent=1 // loop_body
      %s16 = ssub.s32 %s11, 1
      %s17 = ssub.s32 %s11, 2
      %s24 = sadd.s32 1, %s19
      %p25 = scmp.ge.s32.totalorder %s24, 2
      %s26 = scalar_select %p25, 0, %s24
      %s27 = sadd.s32 1, %s18
      %s28 = scalar_select %p25, %s27, %s18
      %p29 = scmp.ge.s32.totalorder %s28, 1
      %s30 = scalar_select %p29, 0, %s28
      %s31 = ssub.s32 %s18, %s30
      %p32 = scmp.eq.s32.totalorder %s31, 0
      %s34 = sadd.s32 %s33, 1
      %s35 = scalar_select %p32, %s33, %s34
      %p38 = pneg %p32
      %p39 = scmp.eq.s32.totalorder %s11, 1
      %p40 = por %p38, %p39
      %p41 = scmp.ne.s32.totalorder %s33, %s36
      %p42 = scmp.eq.s32.totalorder %s11, 0
      %p43 = por %p41, %p42
      %p44 = scmp.ne.s32.totalorder %s33, %s36
      %p45 = scmp.eq.s32.totalorder %s16, 1
      %p46 = por %p44, %p45
      %p47 = scmp.ne.s32.totalorder %s36, %s37
      %p48 = scmp.eq.s32.totalorder %s16, 0
      %p49 = por %p47, %p48
      %p50 = scmp.ne.s32.totalorder %s36, %s37
      %p51 = scmp.eq.s32.totalorder %s17, 1
      %p52 = por %p50, %p51
      %p54 = scmp.ne.s32.totalorder %s37, %s53
      %p55 = scmp.eq.s32.totalorder %s17, 0
      %p56 = por %p54, %p55
      %s57 = ssub.s32 %s19, %s26
      %p58 = scmp.eq.s32.totalorder %s57, 0
      %s60 = sadd.s32 %s59, 1
      %s61 = scalar_select %p58, %s59, %s60
      %p64 = pneg %p58
      %p65 = scmp.eq.s32.totalorder %s11, 1
      %p66 = por %p64, %p65
      %p67 = scmp.ne.s32.totalorder %s59, %s62
      %p68 = scmp.eq.s32.totalorder %s11, 0
      %p69 = por %p67, %p68
      %p70 = scmp.ne.s32.totalorder %s59, %s62
      %p71 = scmp.eq.s32.totalorder %s16, 1
      %p72 = por %p70, %p71
      %p73 = scmp.ne.s32.totalorder %s62, %s63
      %p74 = scmp.eq.s32.totalorder %s16, 0
      %p75 = por %p73, %p74
      %p76 = scmp.ne.s32.totalorder %s62, %s63
      %p77 = scmp.eq.s32.totalorder %s17, 1
      %p78 = por %p76, %p77
      %p80 = scmp.ne.s32.totalorder %s63, %s79
      %p81 = scmp.eq.s32.totalorder %s17, 0
      %p82 = por %p80, %p81
      %s83 = ssub.s32 %s18, %s30
      %s84 = ssub.s32 %s19, %s26
      %s85 = sor.u32 %s83, %s84
      %p86 = scmp.eq.s32.totalorder %s85, 0
      %s88 = sadd.s32 %s87, 1
      %s89 = scalar_select %p86, %s87, %s88
      %p92 = pneg %p86
      %p93 = scmp.eq.s32.totalorder %s11, 1
      %p94 = por %p92, %p93
      %p95 = scmp.ne.s32.totalorder %s87, %s90
      %p96 = scmp.eq.s32.totalorder %s11, 0
      %p97 = por %p95, %p96
      %p98 = scmp.ne.s32.totalorder %s87, %s90
      %p99 = scmp.eq.s32.totalorder %s16, 1
      %p100 = por %p98, %p99
      %p101 = scmp.ne.s32.totalorder %s90, %s91
      %p102 = scmp.eq.s32.totalorder %s16, 0
      %p103 = por %p101, %p102
      %p104 = scmp.ne.s32.totalorder %s90, %s91
      %p105 = scmp.eq.s32.totalorder %s17, 1
      %p106 = por %p104, %p105
      %p108 = scmp.ne.s32.totalorder %s91, %s107
      %p109 = scmp.eq.s32.totalorder %s17, 0
      %p110 = por %p108, %p109
      %p111 = scmp.le.s32.totalorder 1, %s11
      %p112 = scmp.lt.s32.totalorder %s11, 3
      %p113 = pnand %p111, %p112
      %p114 = pneg %p113
      // Predicated region
      $region9: #{cos_similarity.1} parent=5 // pred_check
        _
      $region10: #{cos_similarity.1} parent=5 // pred_check_branch
        %116 = sbr.rel (%p113) target = $region12
      $region11: #{cos_similarity.1} parent=5 // pred_region
        %s117 = ssub.s32 %s11, 1
        // Predicated region
        $region13: #{cos_similarity.1} parent=11 // pred_check
          %p118 = pneg %p49
        $region14: #{cos_similarity.1} parent=11 // pred_check_branch
          %120 = sbr.rel (%p118) target = $region16
        $region15: #{cos_similarity.1} parent=11 // pred_region
          %s121 = smul.u32 2, %s20
          %p122 = scmp.lt.s32.totalorder %s121, 1
          %s123 = scalar_select %p122, %s121, 1
          %s124 = smul.addr %s123, 2
          %s125 = smul.addr %s124, 8
          %s126 = scalar_lea.vmem %s0, %s125
          %s127 = smul.u32 2, %s20
        $region16: #{cos_similarity.1} parent=11 // pred_fallthru
          _
      $region12: #{cos_similarity.1} parent=5 // pred_fallthru
        _
      %p128 = scmp.lt.s32.totalorder %s11, 2
      // Predicated region
      $region17: #{cos_similarity.1} parent=5 // pred_check
        %p129 = pneg %p128
      $region18: #{cos_similarity.1} parent=5 // pred_check_branch
        %131 = sbr.rel (%p129) target = $region20
      $region19: #{cos_similarity.1} parent=5 // pred_region
        // Predicated region
        $region21: #{cos_similarity.1} parent=19 // pred_check
          %p132 = pneg %p69
        $region22: #{cos_similarity.1} parent=19 // pred_check_branch
          %134 = sbr.rel (%p132) target = $region24
        $region23: #{cos_similarity.1} parent=19 // pred_region
          %s135 = sand.u32 %s59, 1
          %s136 = sand.u32 %s59, 1
          %s137 = smul.addr %s136, 512
          %s138 = scalar_lea.vmem [#allocation2], %s137
          %s139 = smul.u32 2, %s19
          %s140 = smul.addr %s139, 8
          %s141 = scalar_lea.vmem %s1, %s140
          // Predicated region
          $region25: #{cos_similarity.1} parent=23 // pred_check
            _
          $region26: #{cos_similarity.1} parent=23 // pred_check_branch
            %143 = sbr.rel (0) target = $region28
          $region27: #{cos_similarity.1} parent=23 // pred_region
            // Predicated region
            $region29: #{cos_similarity.1} parent=27 // pred_check
              _
            $region30: #{cos_similarity.1} parent=27 // pred_check_branch
              %145 = sbr.rel (0) target = $region32
            $region31: #{cos_similarity.1} parent=27 // pred_region
              loop: start=0, step=1, limit=1
              $region33: #{cos_similarity.1} parent=31 // loop_pre_header
                _
              $region34: #{cos_similarity.1} parent=31 // loop_header
                %s147 = sphi 0, %s151
                %p148 = scmp.ge.s32.totalorder %s147, 1
                %s152 = sphi %s141, %s141
                %s153 = sphi %s138, %s138
              $region35: #{cos_similarity.1} parent=31 // loop_header_branch
                %150 = sbr.rel (%p148) target = $region39
              $region36: #{cos_similarity.1} parent=31 // loop_body
                %v154 = vld [vmem:[%s152] sm:$0xff]
                %155 = vst [vmem:[%s153] sm:$0xff] %v154
                %v156 = vld [vmem:[%s152 + $0x8] sm:$0xff]
                %157 = vst [vmem:[%s153 + $0x8] sm:$0xff] %v156
                %v158 = vld [vmem:[%s152 + $0x20] sm:$0xff]
                %159 = vst [vmem:[%s153 + $0x10] sm:$0xff] %v158
                %v160 = vld [vmem:[%s152 + $0x28] sm:$0xff]
                %161 = vst [vmem:[%s153 + $0x18] sm:$0xff] %v160
                %v162 = vld [vmem:[%s152 + $0x40] sm:$0xff]
                %163 = vst [vmem:[%s153 + $0x20] sm:$0xff] %v162
                %v164 = vld [vmem:[%s152 + $0x48] sm:$0xff]
                %165 = vst [vmem:[%s153 + $0x28] sm:$0xff] %v164
                %v166 = vld [vmem:[%s152 + $0x60] sm:$0xff]
                %167 = vst [vmem:[%s153 + $0x30] sm:$0xff] %v166
                %v168 = vld [vmem:[%s152 + $0x68] sm:$0xff]
                %169 = vst [vmem:[%s153 + $0x38] sm:$0xff] %v168
                %v170 = vld [vmem:[%s152 + $0x80] sm:$0xff]
                %171 = vst [vmem:[%s153 + $0x40] sm:$0xff] %v170
                %v172 = vld [vmem:[%s152 + $0x88] sm:$0xff]
                %173 = vst [vmem:[%s153 + $0x48] sm:$0xff] %v172
                %v174 = vld [vmem:[%s152 + $0xa0] sm:$0xff]
                %175 = vst [vmem:[%s153 + $0x50] sm:$0xff] %v174
                %v176 = vld [vmem:[%s152 + $0xa8] sm:$0xff]
                %177 = vst [vmem:[%s153 + $0x58] sm:$0xff] %v176
                %v178 = vld [vmem:[%s152 + $0xc0] sm:$0xff]
                %179 = vst [vmem:[%s153 + $0x60] sm:$0xff] %v178
                %v180 = vld [vmem:[%s152 + $0xc8] sm:$0xff]
                %181 = vst [vmem:[%s153 + $0x68] sm:$0xff] %v180
                %v182 = vld [vmem:[%s152 + $0xe0] sm:$0xff]
                %183 = vst [vmem:[%s153 + $0x70] sm:$0xff] %v182
                %v184 = vld [vmem:[%s152 + $0xe8] sm:$0xff]
                %185 = vst [vmem:[%s153 + $0x78] sm:$0xff] %v184
                %v186 = vld [vmem:[%s152 + $0x100] sm:$0xff]
                %187 = vst [vmem:[%s153 + $0x80] sm:$0xff] %v186
                %v188 = vld [vmem:[%s152 + $0x108] sm:$0xff]
                %189 = vst [vmem:[%s153 + $0x88] sm:$0xff] %v188
                %v190 = vld [vmem:[%s152 + $0x120] sm:$0xff]
                %191 = vst [vmem:[%s153 + $0x90] sm:$0xff] %v190
                %v192 = vld [vmem:[%s152 + $0x128] sm:$0xff]
                %193 = vst [vmem:[%s153 + $0x98] sm:$0xff] %v192
                %v194 = vld [vmem:[%s152 + $0x140] sm:$0xff]
                %195 = vst [vmem:[%s153 + $0xa0] sm:$0xff] %v194
                %v196 = vld [vmem:[%s152 + $0x148] sm:$0xff]
                %197 = vst [vmem:[%s153 + $0xa8] sm:$0xff] %v196
                %v198 = vld [vmem:[%s152 + $0x160] sm:$0xff]
                %199 = vst [vmem:[%s153 + $0xb0] sm:$0xff] %v198
                %v200 = vld [vmem:[%s152 + $0x168] sm:$0xff]
                %201 = vst [vmem:[%s153 + $0xb8] sm:$0xff] %v200
                %v202 = vld [vmem:[%s152 + $0x180] sm:$0xff]
                %203 = vst [vmem:[%s153 + $0xc0] sm:$0xff] %v202
                %v204 = vld [vmem:[%s152 + $0x188] sm:$0xff]
                %205 = vst [vmem:[%s153 + $0xc8] sm:$0xff] %v204
                %v206 = vld [vmem:[%s152 + $0x1a0] sm:$0xff]
                %207 = vst [vmem:[%s153 + $0xd0] sm:$0xff] %v206
                %v208 = vld [vmem:[%s152 + $0x1a8] sm:$0xff]
                %209 = vst [vmem:[%s153 + $0xd8] sm:$0xff] %v208
                %v210 = vld [vmem:[%s152 + $0x1c0] sm:$0xff]
                %211 = vst [vmem:[%s153 + $0xe0] sm:$0xff] %v210
                %v212 = vld [vmem:[%s152 + $0x1c8] sm:$0xff]
                %213 = vst [vmem:[%s153 + $0xe8] sm:$0xff] %v212
                %v214 = vld [vmem:[%s152 + $0x1e0] sm:$0xff]
                %215 = vst [vmem:[%s153 + $0xf0] sm:$0xff] %v214
                %v216 = vld [vmem:[%s152 + $0x1e8] sm:$0xff]
                %217 = vst [vmem:[%s153 + $0xf8] sm:$0xff] %v216
                %v218 = vld [vmem:[%s152 + $0x200] sm:$0xff]
                %219 = vst [vmem:[%s153 + $0x100] sm:$0xff] %v218
                %v220 = vld [vmem:[%s152 + $0x208] sm:$0xff]
                %221 = vst [vmem:[%s153 + $0x108] sm:$0xff] %v220
                %v222 = vld [vmem:[%s152 + $0x220] sm:$0xff]
                %223 = vst [vmem:[%s153 + $0x110] sm:$0xff] %v222
                %v224 = vld [vmem:[%s152 + $0x228] sm:$0xff]
                %225 = vst [vmem:[%s153 + $0x118] sm:$0xff] %v224
                %v226 = vld [vmem:[%s152 + $0x240] sm:$0xff]
                %227 = vst [vmem:[%s153 + $0x120] sm:$0xff] %v226
                %v228 = vld [vmem:[%s152 + $0x248] sm:$0xff]
                %229 = vst [vmem:[%s153 + $0x128] sm:$0xff] %v228
                %v230 = vld [vmem:[%s152 + $0x260] sm:$0xff]
                %231 = vst [vmem:[%s153 + $0x130] sm:$0xff] %v230
                %v232 = vld [vmem:[%s152 + $0x268] sm:$0xff]
                %233 = vst [vmem:[%s153 + $0x138] sm:$0xff] %v232
                %v234 = vld [vmem:[%s152 + $0x280] sm:$0xff]
                %235 = vst [vmem:[%s153 + $0x140] sm:$0xff] %v234
                %v236 = vld [vmem:[%s152 + $0x288] sm:$0xff]
                %237 = vst [vmem:[%s153 + $0x148] sm:$0xff] %v236
                %v238 = vld [vmem:[%s152 + $0x2a0] sm:$0xff]
                %239 = vst [vmem:[%s153 + $0x150] sm:$0xff] %v238
                %v240 = vld [vmem:[%s152 + $0x2a8] sm:$0xff]
                %241 = vst [vmem:[%s153 + $0x158] sm:$0xff] %v240
                %v242 = vld [vmem:[%s152 + $0x2c0] sm:$0xff]
                %243 = vst [vmem:[%s153 + $0x160] sm:$0xff] %v242
                %v244 = vld [vmem:[%s152 + $0x2c8] sm:$0xff]
                %245 = vst [vmem:[%s153 + $0x168] sm:$0xff] %v244
                %v246 = vld [vmem:[%s152 + $0x2e0] sm:$0xff]
                %247 = vst [vmem:[%s153 + $0x170] sm:$0xff] %v246
                %v248 = vld [vmem:[%s152 + $0x2e8] sm:$0xff]
                %249 = vst [vmem:[%s153 + $0x178] sm:$0xff] %v248
                %v250 = vld [vmem:[%s152 + $0x300] sm:$0xff]
                %251 = vst [vmem:[%s153 + $0x180] sm:$0xff] %v250
                %v252 = vld [vmem:[%s152 + $0x308] sm:$0xff]
                %253 = vst [vmem:[%s153 + $0x188] sm:$0xff] %v252
                %v254 = vld [vmem:[%s152 + $0x320] sm:$0xff]
                %255 = vst [vmem:[%s153 + $0x190] sm:$0xff] %v254
                %v256 = vld [vmem:[%s152 + $0x328] sm:$0xff]
                %257 = vst [vmem:[%s153 + $0x198] sm:$0xff] %v256
                %v258 = vld [vmem:[%s152 + $0x340] sm:$0xff]
                %259 = vst [vmem:[%s153 + $0x1a0] sm:$0xff] %v258
                %v260 = vld [vmem:[%s152 + $0x348] sm:$0xff]
                %261 = vst [vmem:[%s153 + $0x1a8] sm:$0xff] %v260
                %v262 = vld [vmem:[%s152 + $0x360] sm:$0xff]
                %263 = vst [vmem:[%s153 + $0x1b0] sm:$0xff] %v262
                %v264 = vld [vmem:[%s152 + $0x368] sm:$0xff]
                %265 = vst [vmem:[%s153 + $0x1b8] sm:$0xff] %v264
                %v266 = vld [vmem:[%s152 + $0x380] sm:$0xff]
                %267 = vst [vmem:[%s153 + $0x1c0] sm:$0xff] %v266
                %v268 = vld [vmem:[%s152 + $0x388] sm:$0xff]
                %269 = vst [vmem:[%s153 + $0x1c8] sm:$0xff] %v268
                %v270 = vld [vmem:[%s152 + $0x3a0] sm:$0xff]
                %271 = vst [vmem:[%s153 + $0x1d0] sm:$0xff] %v270
                %v272 = vld [vmem:[%s152 + $0x3a8] sm:$0xff]
                %273 = vst [vmem:[%s153 + $0x1d8] sm:$0xff] %v272
                %v274 = vld [vmem:[%s152 + $0x3c0] sm:$0xff]
                %275 = vst [vmem:[%s153 + $0x1e0] sm:$0xff] %v274
                %v276 = vld [vmem:[%s152 + $0x3c8] sm:$0xff]
                %277 = vst [vmem:[%s153 + $0x1e8] sm:$0xff] %v276
                %v278 = vld [vmem:[%s152 + $0x3e0] sm:$0xff]
                %279 = vst [vmem:[%s153 + $0x1f0] sm:$0xff] %v278
                %v280 = vld [vmem:[%s152 + $0x3e8] sm:$0xff]
                %281 = vst [vmem:[%s153 + $0x1f8] sm:$0xff] %v280
              $region37: #{cos_similarity.1} parent=31 // loop_footer
                %s151 = sadd.s32 1, %s147
              $region38: #{cos_similarity.1} parent=31 // loop_footer_branch
                %146 = sbr.rel target = $region34
              $region39: #{cos_similarity.1} parent=31 // loop_exit
                _
            $region32: #{cos_similarity.1} parent=27 // pred_fallthru
              _
            // Predicated region
            $region40: #{cos_similarity.1} parent=27 // pred_check
              _
            $region41: #{cos_similarity.1} parent=27 // pred_check_branch
              %283 = sbr.rel target = $region43
            $region42: #{cos_similarity.1} parent=27 // pred_region
              _
            $region43: #{cos_similarity.1} parent=27 // pred_fallthru
              _
          $region28: #{cos_similarity.1} parent=23 // pred_fallthru
            _
          %284 = vnop
        $region24: #{cos_similarity.1} parent=19 // pred_fallthru
          _
      $region20: #{cos_similarity.1} parent=5 // pred_fallthru
        _
      %p285 = scmp.le.s32.totalorder 1, %s11
      %p286 = scmp.lt.s32.totalorder %s11, 3
      %p287 = pnand %p285, %p286
      %p288 = pneg %p287
      // Predicated region
      $region44: #{cos_similarity.1} parent=5 // pred_check
        _
      $region45: #{cos_similarity.1} parent=5 // pred_check_branch
        %290 = sbr.rel (%p287) target = $region47
      $region46: #{cos_similarity.1} parent=5 // pred_region
        %s291 = ssub.s32 %s11, 1
        %s292 = sand.u32 %s62, 1
        %s293 = sand.u32 %s62, 1
        %s294 = smul.addr %s293, 512
        %s295 = scalar_lea.vmem [#allocation2], %s294
        // Predicated region
        $region48: #{cos_similarity.1} parent=46 // pred_check
          %p296 = pneg %p75
        $region49: #{cos_similarity.1} parent=46 // pred_check_branch
          %298 = sbr.rel (%p296) target = $region51
        $region50: #{cos_similarity.1} parent=46 // pred_region
          _
        $region51: #{cos_similarity.1} parent=46 // pred_fallthru
          _
        %s299 = smul.u32 2, %s20
        %p300 = scmp.lt.s32.totalorder %s299, 1
        %s301 = scalar_select %p300, %s299, 1
        %s302 = smul.addr %s301, 2
        %s303 = smul.addr %s302, 8
        %s304 = scalar_lea.vmem %s0, %s303
        %p305 = pneg %p49
        %p306 = pneg %p46
        %s307 = sand.u32 %s62, 1
        %s308 = sand.u32 %s62, 1
        %s309 = smul.addr %s308, 512
        %s310 = scalar_lea.vmem [#allocation2], %s309
        %p311 = pneg %p75
        %p312 = pneg %p72
        %p313 = pneg %p103
        %p314 = pneg %p100
        %s315 = sand.u32 %s90, 1
        %s316 = scalar_lea.sflag [#allocation4], %s315
        %s317 = sand.u32 %s90, 1
        %s318 = smul.addr %s317, 32
        %s319 = scalar_lea.vmem [#allocation3], %s318
        %s320 = smul.u32 2, %s20
        %p321 = scmp.lt.s32.totalorder %s320, 1
        %s322 = scalar_select %p321, %s320, 1
        %s323 = smul.addr %s322, 2
        %s324 = smul.addr %s323, 8
        %s325 = scalar_lea.vmem %s0, %s324
        %s326 = smul.u32 2, %s20
        %s327 = smul.u32 2, %s21
        %s328 = smul.u32 2, %s20
        %s329 = smul.u32 2, %s21
        %v330 = vld [vmem:[%s325] sm:$0xff]
        %v331 = vld [vmem:[%s325 + $0x8] sm:$0xff]
        %v332 = vld [vmem:[%s325 + $0x10] sm:$0xff]
        %v333 = vld [vmem:[%s325 + $0x18] sm:$0xff]
        %v334 = vld [vmem:[%s295] sm:$0xff]
        %v335 = vld [vmem:[%s295 + $0x8] sm:$0xff]
        %v336 = vld [vmem:[%s295 + $0x10] sm:$0xff]
        %v337 = vld [vmem:[%s295 + $0x18] sm:$0xff]
        %v338 = vld [vmem:[%s295 + $0x20] sm:$0xff]
        %v339 = vld [vmem:[%s295 + $0x28] sm:$0xff]
        %v340 = vld [vmem:[%s295 + $0x30] sm:$0xff]
        %v341 = vld [vmem:[%s295 + $0x38] sm:$0xff]
        %v342 = vld [vmem:[%s295 + $0x40] sm:$0xff]
        %v343 = vld [vmem:[%s295 + $0x48] sm:$0xff]
        %v344 = vld [vmem:[%s295 + $0x50] sm:$0xff]
        %v345 = vld [vmem:[%s295 + $0x58] sm:$0xff]
        %v346 = vld [vmem:[%s295 + $0x60] sm:$0xff]
        %v347 = vld [vmem:[%s295 + $0x68] sm:$0xff]
        %v348 = vld [vmem:[%s295 + $0x70] sm:$0xff]
        %v349 = vld [vmem:[%s295 + $0x78] sm:$0xff]
        %v350 = vld [vmem:[%s295 + $0x80] sm:$0xff]
        %v351 = vld [vmem:[%s295 + $0x88] sm:$0xff]
        %v352 = vld [vmem:[%s295 + $0x90] sm:$0xff]
        %v353 = vld [vmem:[%s295 + $0x98] sm:$0xff]
        %v354 = vld [vmem:[%s295 + $0xa0] sm:$0xff]
        %v355 = vld [vmem:[%s295 + $0xa8] sm:$0xff]
        %v356 = vld [vmem:[%s295 + $0xb0] sm:$0xff]
        %v357 = vld [vmem:[%s295 + $0xb8] sm:$0xff]
        %v358 = vld [vmem:[%s295 + $0xc0] sm:$0xff]
        %v359 = vld [vmem:[%s295 + $0xc8] sm:$0xff]
        %v360 = vld [vmem:[%s295 + $0xd0] sm:$0xff]
        %v361 = vld [vmem:[%s295 + $0xd8] sm:$0xff]
        %v362 = vld [vmem:[%s295 + $0xe0] sm:$0xff]
        %v363 = vld [vmem:[%s295 + $0xe8] sm:$0xff]
        %v364 = vld [vmem:[%s295 + $0xf0] sm:$0xff]
        %v365 = vld [vmem:[%s295 + $0xf8] sm:$0xff]
        %v366 = vld [vmem:[%s295 + $0x100] sm:$0xff]
        %v367 = vld [vmem:[%s295 + $0x108] sm:$0xff]
        %v368 = vld [vmem:[%s295 + $0x110] sm:$0xff]
        %v369 = vld [vmem:[%s295 + $0x118] sm:$0xff]
        %v370 = vld [vmem:[%s295 + $0x120] sm:$0xff]
        %v371 = vld [vmem:[%s295 + $0x128] sm:$0xff]
        %v372 = vld [vmem:[%s295 + $0x130] sm:$0xff]
        %v373 = vld [vmem:[%s295 + $0x138] sm:$0xff]
        %v374 = vld [vmem:[%s295 + $0x140] sm:$0xff]
        %v375 = vld [vmem:[%s295 + $0x148] sm:$0xff]
        %v376 = vld [vmem:[%s295 + $0x150] sm:$0xff]
        %v377 = vld [vmem:[%s295 + $0x158] sm:$0xff]
        %v378 = vld [vmem:[%s295 + $0x160] sm:$0xff]
        %v379 = vld [vmem:[%s295 + $0x168] sm:$0xff]
        %v380 = vld [vmem:[%s295 + $0x170] sm:$0xff]
        %v381 = vld [vmem:[%s295 + $0x178] sm:$0xff]
        %v382 = vld [vmem:[%s295 + $0x180] sm:$0xff]
        %v383 = vld [vmem:[%s295 + $0x188] sm:$0xff]
        %v384 = vld [vmem:[%s295 + $0x190] sm:$0xff]
        %v385 = vld [vmem:[%s295 + $0x198] sm:$0xff]
        %v386 = vld [vmem:[%s295 + $0x1a0] sm:$0xff]
        %v387 = vld [vmem:[%s295 + $0x1a8] sm:$0xff]
        %v388 = vld [vmem:[%s295 + $0x1b0] sm:$0xff]
        %v389 = vld [vmem:[%s295 + $0x1b8] sm:$0xff]
        %v390 = vld [vmem:[%s295 + $0x1c0] sm:$0xff]
        %v391 = vld [vmem:[%s295 + $0x1c8] sm:$0xff]
        %v392 = vld [vmem:[%s295 + $0x1d0] sm:$0xff]
        %v393 = vld [vmem:[%s295 + $0x1d8] sm:$0xff]
        %v394 = vld [vmem:[%s295 + $0x1e0] sm:$0xff]
        %v395 = vld [vmem:[%s295 + $0x1e8] sm:$0xff]
        %v396 = vld [vmem:[%s295 + $0x1f0] sm:$0xff]
        %v397 = vld [vmem:[%s295 + $0x1f8] sm:$0xff]
        %398 = vmatprep.subr.mxu0 %v335
        %399 = vmatpush1.msra.mxu0 %v334
        %400 = vmatprep.subr.mxu0 %v337
        %401 = vmatpush1.msra.mxu0 %v336
        %402 = vmatprep.subr.mxu0 %v339
        %403 = vmatpush1.msra.mxu0 %v338
        %404 = vmatprep.subr.mxu0 %v341
        %405 = vmatpush1.msra.mxu0 %v340
        %406 = vmatprep.subr.mxu0 %v343
        %407 = vmatpush1.msra.mxu0 %v342
        %408 = vmatprep.subr.mxu0 %v345
        %409 = vmatpush1.msra.mxu0 %v344
        %410 = vmatprep.subr.mxu0 %v347
        %411 = vmatpush1.msra.mxu0 %v346
        %412 = vmatprep.subr.mxu0 %v349
        %413 = vmatpush1.msra.mxu0 %v348
        %414 = vmatprep.subr.mxu0 %v351
        %415 = vmatpush1.msra.mxu0 %v350
        %416 = vmatprep.subr.mxu0 %v353
        %417 = vmatpush1.msra.mxu0 %v352
        %418 = vmatprep.subr.mxu0 %v355
        %419 = vmatpush1.msra.mxu0 %v354
        %420 = vmatprep.subr.mxu0 %v357
        %421 = vmatpush1.msra.mxu0 %v356
        %422 = vmatprep.subr.mxu0 %v359
        %423 = vmatpush1.msra.mxu0 %v358
        %424 = vmatprep.subr.mxu0 %v361
        %425 = vmatpush1.msra.mxu0 %v360
        %426 = vmatprep.subr.mxu0 %v363
        %427 = vmatpush1.msra.mxu0 %v362
        %428 = vmatprep.subr.mxu0 %v365
        %429 = vmatpush1.msra.mxu0 %v364
        %430 = vmatprep.subr.mxu0 %v367
        %431 = vmatpush1.msra.mxu0 %v366
        %432 = vmatprep.subr.mxu0 %v369
        %433 = vmatpush1.msra.mxu0 %v368
        %434 = vmatprep.subr.mxu0 %v371
        %435 = vmatpush1.msra.mxu0 %v370
        %436 = vmatprep.subr.mxu0 %v373
        %437 = vmatpush1.msra.mxu0 %v372
        %438 = vmatprep.subr.mxu0 %v375
        %439 = vmatpush1.msra.mxu0 %v374
        %440 = vmatprep.subr.mxu0 %v377
        %441 = vmatpush1.msra.mxu0 %v376
        %442 = vmatprep.subr.mxu0 %v379
        %443 = vmatpush1.msra.mxu0 %v378
        %444 = vmatprep.subr.mxu0 %v381
        %445 = vmatpush1.msra.mxu0 %v380
        %446 = vmatprep.subr.mxu0 %v383
        %447 = vmatpush1.msra.mxu0 %v382
        %448 = vmatprep.subr.mxu0 %v385
        %449 = vmatpush1.msra.mxu0 %v384
        %450 = vmatprep.subr.mxu0 %v387
        %451 = vmatpush1.msra.mxu0 %v386
        %452 = vmatprep.subr.mxu0 %v389
        %453 = vmatpush1.msra.mxu0 %v388
        %454 = vmatprep.subr.mxu0 %v391
        %455 = vmatpush1.msra.mxu0 %v390
        %456 = vmatprep.subr.mxu0 %v393
        %457 = vmatpush1.msra.mxu0 %v392
        %458 = vmatprep.subr.mxu0 %v395
        %459 = vmatpush1.msra.mxu0 %v394
        %460 = vmatprep.subr.mxu0 %v397
        %461 = vmatpush1.msra.mxu0 %v396
        %462 = vmatprep.mubr.f32.mxu0 %v331
        %463 = vmatmul.mubr.f32.gmra.mrb[0].mxu0 %v330
        %v464 = vpop.f32.mrb[0].mxu0
        %v465 = vadd.f32 0.0, %v464
        %v466 = vpop.f32.mrb[0].mxu0
        %v467 = vadd.f32 0.0, %v466
        %468 = vmatprep.mubr.f32.mxu0 %v333
        %469 = vmatmul.mubr.f32.gmra.mrb[0].mxu0 %v332
        %v470 = vpop.f32.mrb[0].mxu0
        %v471 = vadd.f32 0.0, %v470
        %v472 = vpop.f32.mrb[0].mxu0
        %v473 = vadd.f32 0.0, %v472
        %474 = vdwg.mxu0
        %v475 = vmax.f32 %v465, 0.0
        %v476 = vmax.f32 %v467, 0.0
        %v477 = vmax.f32 %v471, 0.0
        %v478 = vmax.f32 %v473, 0.0
        %479 = vst [vmem:[%s319] sm:$0xff] %v475
        %480 = vst [vmem:[%s319 + $0x8] sm:$0xff] %v476
        %481 = vst [vmem:[%s319 + $0x10] sm:$0xff] %v477
        %482 = vst [vmem:[%s319 + $0x18] sm:$0xff] %v478
        %s483 = sand.u32 %s90, 1
        %s484 = scalar_lea.sflag [#allocation4], %s483
        %s485 = sand.u32 %s90, 1
        %s486 = smul.addr %s485, 32
        %s487 = scalar_lea.vmem [#allocation3], %s486
        // Predicated region
        $region52: #{cos_similarity.1} parent=46 // pred_check
          %p488 = pneg %p100
        $region53: #{cos_similarity.1} parent=46 // pred_check_branch
          %490 = sbr.rel (%p488) target = $region55
        $region54: #{cos_similarity.1} parent=46 // pred_region
          %s491 = smul.u32 2, %s20
          %s492 = smul.u32 2, %s21
          %s494 = ssub.s32 512, 512
          %495 = vsyncadd %s484, %s494
          %s496 = smul.addr %s491, 4
          %s497 = sadd.s32 %s492, %s496
          %s498 = smul.addr %s497, 128
          %s499 = scalar_lea.hbm %s2, %s498
          %s500 = sshll.u32 %s487, 4
          %s501 = int_to_ptr.vmem [resolvable:$true] %s500
          %506 = dma.vmem_to_hbm [thread:$0]  %s501, 512, %s499, %s484, 256, 512, 16
        $region55: #{cos_similarity.1} parent=46 // pred_fallthru
          _
      $region47: #{cos_similarity.1} parent=5 // pred_fallthru
        _
      %p507 = scmp.le.s32.totalorder 2, %s11
      // Predicated region
      $region56: #{cos_similarity.1} parent=5 // pred_check
        %p508 = pneg %p507
      $region57: #{cos_similarity.1} parent=5 // pred_check_branch
        %510 = sbr.rel (%p508) target = $region59
      $region58: #{cos_similarity.1} parent=5 // pred_region
        %s511 = ssub.s32 %s11, 2
        // Predicated region
        $region60: #{cos_similarity.1} parent=58 // pred_check
          %p512 = pneg %p106
        $region61: #{cos_similarity.1} parent=58 // pred_check_branch
          %514 = sbr.rel (%p512) target = $region63
        $region62: #{cos_similarity.1} parent=58 // pred_region
          %s515 = sand.u32 %s91, 1
          %s516 = scalar_lea.sflag [#allocation4], %s515
          %s517 = sand.u32 %s91, 1
          %s518 = smul.addr %s517, 32
          %s519 = scalar_lea.vmem [#allocation3], %s518
          %520 = dma.done %s516, 512
        $region63: #{cos_similarity.1} parent=58 // pred_fallthru
          _
      $region59: #{cos_similarity.1} parent=5 // pred_fallthru
        _
    $region6: #{cos_similarity.1} parent=1 // loop_footer
      %s15 = sadd.s32 1, %s11
    $region7: #{cos_similarity.1} parent=1 // loop_footer_branch
      %10 = sbr.rel target = $region3
    $region8: #{cos_similarity.1} parent=1 // loop_exit
      _
    %521 = vsyncpa [#allocation4], 1
    %s522 = scalar_lea.sflag [#allocation4], 1
    %523 = vsyncpa %s522, 1

</llo_original>
